<compile_context>
chip_gen: v5e
topology: v5e:2x2
jax: 0.10.0
libtpu: 0.0.40
codegen_flags: <defaults>
</compile_context>

<pallas_src>
import jax
import jax.numpy as jnp
from jax.experimental import pallas as pl
from jax.experimental.pallas import tpu as pltpu

_LANE = 128
_SUBLANE = 8


def _round_up(x, m):
    return ((x + m - 1) // m) * m


def _icm_inverse_kernel(s_ref, ns_ref, w1a_ref, w1b_ref, b1_ref,
                        w2_ref, b2_ref, w3_ref, b3_ref, o_ref):
    # Layer 1: fused concat via split weights. bf16 operands, f32 accumulate.
    h1 = jnp.dot(s_ref[...], w1a_ref[...], preferred_element_type=jnp.float32)
    h1 = h1 + jnp.dot(ns_ref[...], w1b_ref[...],
                      preferred_element_type=jnp.float32)
    h1 = jnp.maximum(h1 + b1_ref[...], 0.0)            # f32 bias + ReLU (VPU)
    # Layer 2
    h2 = jnp.dot(h1.astype(w2_ref.dtype), w2_ref[...],
                 preferred_element_type=jnp.float32)
    h2 = jnp.maximum(h2 + b2_ref[...], 0.0)
    # Layer 3 (output lane-padded to 128)
    out = jnp.dot(h2.astype(w3_ref.dtype), w3_ref[...],
                  preferred_element_type=jnp.float32) + b3_ref[...]
    o_ref[...] = out.astype(o_ref.dtype)


def icm_inverse_forward(state, next_state, params, *, block_batch=256,
                        compute_dtype=jnp.bfloat16):
    """Pallas implementation of DiscreteICMInverseModel.forward.

    params = (w1, b1, w2, b2, w3, b3), weights stored [in, out] (transposed
    vs. torch nn.Linear) and biases shaped (1, out).
    """
    w1, b1, w2, b2, w3, b3 = params
    B, D = state.shape
    H = w1.shape[1]
    A = w3.shape[1]

    # --- fuse the concat: split W1 row-wise into state / next_state halves.
    w1a = w1[:D].astype(compute_dtype)
    w1b = w1[D:].astype(compute_dtype)
    w2c = w2.astype(compute_dtype)

    # --- pad the action dim to a lane-dense 128-wide output block.
    A_pad = _round_up(A, _LANE)
    w3c = jnp.zeros((H, A_pad), compute_dtype).at[:, :A].set(
        w3.astype(compute_dtype))
    b3p = jnp.zeros((1, A_pad), jnp.float32).at[:, :A].set(
        b3.astype(jnp.float32))
    b1f = b1.astype(jnp.float32)
    b2f = b2.astype(jnp.float32)

    # --- batch tiling: big MXU-friendly tile, sublane aligned, pad if needed.
    bm = min(block_batch, _round_up(B, _SUBLANE))
    B_pad = _round_up(B, bm)
    if B_pad != B:
        pad = ((0, B_pad - B), (0, 0))
        state = jnp.pad(state, pad)
        next_state = jnp.pad(next_state, pad)
    s = state.astype(compute_dtype)
    ns = next_state.astype(compute_dtype)

    grid = (B_pad // bm,)
    const = lambda shape: pl.BlockSpec(shape, lambda i: (0, 0))

    out = pl.pallas_call(
        _icm_inverse_kernel,
        out_shape=jax.ShapeDtypeStruct((B_pad, A_pad), jnp.float32),
        grid_spec=pltpu.PrefetchScalarGridSpec(
            num_scalar_prefetch=0,
            grid=grid,
            in_specs=[
                pl.BlockSpec((bm, D), lambda i: (i, 0)),   # state tile
                pl.BlockSpec((bm, D), lambda i: (i, 0)),   # next_state tile
                const((D, H)),       # W1a
                const((D, H)),       # W1b
                const((1, H)),       # b1
                const((H, H)),       # W2
                const((1, H)),       # b2
                const((H, A_pad)),   # W3 (lane padded)
                const((1, A_pad)),   # b3 (lane padded)
            ],
            out_specs=pl.BlockSpec((bm, A_pad), lambda i: (i, 0)),
        ),
        compiler_params=pltpu.CompilerParams(
            dimension_semantics=("parallel",)),
    )(s, ns, w1a, w1b, b1f, w2c, b2f, w3c, b3p)

    return out[:B, :A].astype(state.dtype)


def init_params(key, latent_state_dim, num_actions, hidden_size=256,
                dtype=jnp.float32):
    """Match nn.Linear's U(-1/sqrt(fan_in), 1/sqrt(fan_in)); weights [in, out]."""
    dims = [(latent_state_dim * 2, hidden_size),
            (hidden_size, hidden_size),
            (hidden_size, num_actions)]
    params = []
    for fan_in, fan_out in dims:
        key, kw, kb = jax.random.split(key, 3)
        bound = 1.0 / (fan_in ** 0.5)
        w = jax.random.uniform(kw, (fan_in, fan_out), dtype, -bound, bound)
        b = jax.random.uniform(kb, (1, fan_out), dtype, -bound, bound)
        params.extend([w, b])
    return tuple(params)


def _reference(state, next_state, params):
    w1, b1, w2, b2, w3, b3 = params
    x = jnp.concatenate([state, next_state], axis=-1)
    h = jnp.maximum(x @ w1 + b1, 0.0)
    h = jnp.maximum(h @ w2 + b2, 0.0)
    return h @ w3 + b3


if __name__ == "__main__":
    B = 20    # batch (not a multiple of 8 -> exercises pad/slice path)
    D = 32    # latent_state_dim
    A = 6     # num_actions (exercises lane padding 6 -> 128)
    H = 256   # hidden_size (module default)

    key = jax.random.PRNGKey(0)
    kp, ks, kn = jax.random.split(key, 3)
    params = init_params(kp, D, A, H)
    state = jax.random.normal(ks, (B, D), jnp.float32)
    next_state = jax.random.normal(kn, (B, D), jnp.float32)

    out = icm_inverse_forward(state, next_state, params)
    out = jax.block_until_ready(out)

    ref = _reference(state, next_state, params)
    assert out.shape == (B, A), out.shape
    # bf16 matmul operands with f32 accumulation -> loosened tolerance vs f32 ref.
    assert jnp.allclose(out, ref, atol=3e-2, rtol=3e-2), (
        float(jnp.max(jnp.abs(out - ref))))
    print("KERNEL_OK")
</pallas_src>

<mosaic_0001>
module attributes {stable_mosaic.version = 11 : i64} {
  func.func @_icm_inverse_kernel(%arg0: i32, %arg1: memref<24x32xbf16, #tpu.memory_space<vmem>>, %arg2: memref<24x32xbf16, #tpu.memory_space<vmem>>, %arg3: memref<32x256xbf16, #tpu.memory_space<vmem>>, %arg4: memref<32x256xbf16, #tpu.memory_space<vmem>>, %arg5: memref<1x256xf32, #tpu.memory_space<vmem>>, %arg6: memref<256x256xbf16, #tpu.memory_space<vmem>>, %arg7: memref<1x256xf32, #tpu.memory_space<vmem>>, %arg8: memref<256x128xbf16, #tpu.memory_space<vmem>>, %arg9: memref<1x128xf32, #tpu.memory_space<vmem>>, %arg10: memref<24x128xf32, #tpu.memory_space<vmem>>) attributes {dimension_semantics = [#tpu.dimension_semantics<parallel>], iteration_bounds = array<i64: 1>, scalar_prefetch = 0 : i64, scratch_operands = 0 : i64, tpu.core_type = #tpu.core_type<tc>, window_params = [{transform_indices = @transform_0, window_bounds = array<i64: 24, 32>}, {transform_indices = @transform_1, window_bounds = array<i64: 24, 32>}, {pipeline_mode = #tpu.pipeline_mode<synchronous>, transform_indices = @transform_2, window_bounds = array<i64: 32, 256>}, {pipeline_mode = #tpu.pipeline_mode<synchronous>, transform_indices = @transform_3, window_bounds = array<i64: 32, 256>}, {pipeline_mode = #tpu.pipeline_mode<synchronous>, transform_indices = @transform_4, window_bounds = array<i64: 1, 256>}, {pipeline_mode = #tpu.pipeline_mode<synchronous>, transform_indices = @transform_5, window_bounds = array<i64: 256, 256>}, {pipeline_mode = #tpu.pipeline_mode<synchronous>, transform_indices = @transform_6, window_bounds = array<i64: 1, 256>}, {pipeline_mode = #tpu.pipeline_mode<synchronous>, transform_indices = @transform_7, window_bounds = array<i64: 256, 128>}, {pipeline_mode = #tpu.pipeline_mode<synchronous>, transform_indices = @transform_8, window_bounds = array<i64: 1, 128>}, {transform_indices = @transform_9, window_bounds = array<i64: 24, 128>}]} {
    %c0 = arith.constant 0 : index
    %c0_0 = arith.constant 0 : index
    %0 = vector.load %arg1[%c0, %c0_0] : memref<24x32xbf16, #tpu.memory_space<vmem>>, vector<24x32xbf16>
    %c0_1 = arith.constant 0 : index
    %c0_2 = arith.constant 0 : index
    %1 = vector.load %arg3[%c0_1, %c0_2] : memref<32x256xbf16, #tpu.memory_space<vmem>>, vector<32x256xbf16>
    %cst = arith.constant dense<0.000000e+00> : vector<24x256xf32>
    %2 = tpu.matmul %0, %1, %cst {dimension_numbers = #tpu.dot_dimension_numbers<[1], [0], [0], [1], [0, 0, 1, 1], [], []>} : vector<24x32xbf16>, vector<32x256xbf16>, vector<24x256xf32> -> vector<24x256xf32>
    %c0_3 = arith.constant 0 : index
    %c0_4 = arith.constant 0 : index
    %3 = vector.load %arg2[%c0_3, %c0_4] : memref<24x32xbf16, #tpu.memory_space<vmem>>, vector<24x32xbf16>
    %c0_5 = arith.constant 0 : index
    %c0_6 = arith.constant 0 : index
    %4 = vector.load %arg4[%c0_5, %c0_6] : memref<32x256xbf16, #tpu.memory_space<vmem>>, vector<32x256xbf16>
    %cst_7 = arith.constant dense<0.000000e+00> : vector<24x256xf32>
    %5 = tpu.matmul %3, %4, %cst_7 {dimension_numbers = #tpu.dot_dimension_numbers<[1], [0], [0], [1], [0, 0, 1, 1], [], []>} : vector<24x32xbf16>, vector<32x256xbf16>, vector<24x256xf32> -> vector<24x256xf32>
    %6 = arith.addf %2, %5 : vector<24x256xf32>
    %c0_8 = arith.constant 0 : index
    %c0_9 = arith.constant 0 : index
    %7 = vector.load %arg5[%c0_8, %c0_9] : memref<1x256xf32, #tpu.memory_space<vmem>>, vector<1x256xf32>
    %8 = vector.broadcast %7 : vector<1x256xf32> to vector<24x256xf32>
    %9 = arith.addf %6, %8 : vector<24x256xf32>
    %cst_10 = arith.constant 0.000000e+00 : f32
    %10 = vector.broadcast %cst_10 : f32 to vector<24x256xf32>
    %11 = arith.maximumf %9, %10 : vector<24x256xf32>
    %12 = arith.truncf %11 : vector<24x256xf32> to vector<24x256xbf16>
    %c0_11 = arith.constant 0 : index
    %c0_12 = arith.constant 0 : index
    %13 = vector.load %arg6[%c0_11, %c0_12] : memref<256x256xbf16, #tpu.memory_space<vmem>>, vector<256x256xbf16>
    %cst_13 = arith.constant dense<0.000000e+00> : vector<24x256xf32>
    %14 = tpu.matmul %12, %13, %cst_13 {dimension_numbers = #tpu.dot_dimension_numbers<[1], [0], [0], [1], [0, 0, 1, 1], [], []>} : vector<24x256xbf16>, vector<256x256xbf16>, vector<24x256xf32> -> vector<24x256xf32>
    %c0_14 = arith.constant 0 : index
    %c0_15 = arith.constant 0 : index
    %15 = vector.load %arg7[%c0_14, %c0_15] : memref<1x256xf32, #tpu.memory_space<vmem>>, vector<1x256xf32>
    %16 = vector.broadcast %15 : vector<1x256xf32> to vector<24x256xf32>
    %17 = arith.addf %14, %16 : vector<24x256xf32>
    %cst_16 = arith.constant 0.000000e+00 : f32
    %18 = vector.broadcast %cst_16 : f32 to vector<24x256xf32>
    %19 = arith.maximumf %17, %18 : vector<24x256xf32>
    %20 = arith.truncf %19 : vector<24x256xf32> to vector<24x256xbf16>
    %c0_17 = arith.constant 0 : index
    %c0_18 = arith.constant 0 : index
    %21 = vector.load %arg8[%c0_17, %c0_18] : memref<256x128xbf16, #tpu.memory_space<vmem>>, vector<256x128xbf16>
    %cst_19 = arith.constant dense<0.000000e+00> : vector<24x128xf32>
    %22 = tpu.matmul %20, %21, %cst_19 {dimension_numbers = #tpu.dot_dimension_numbers<[1], [0], [0], [1], [0, 0, 1, 1], [], []>} : vector<24x256xbf16>, vector<256x128xbf16>, vector<24x128xf32> -> vector<24x128xf32>
    %c0_20 = arith.constant 0 : index
    %c0_21 = arith.constant 0 : index
    %23 = vector.load %arg9[%c0_20, %c0_21] : memref<1x128xf32, #tpu.memory_space<vmem>>, vector<1x128xf32>
    %24 = vector.broadcast %23 : vector<1x128xf32> to vector<24x128xf32>
    %25 = arith.addf %22, %24 : vector<24x128xf32>
    %c0_22 = arith.constant 0 : index
    %c0_23 = arith.constant 0 : index
    %26 = vector.load %arg10[%c0_22, %c0_23] : memref<24x128xf32, #tpu.memory_space<vmem>>, vector<24x128xf32>
    tpu.vector_store %arg10[%c0_22, %c0_23], %25 {strides = array<i32>} : memref<24x128xf32, #tpu.memory_space<vmem>>, vector<24x128xf32>,
    return
  }
  func.func @transform_0(%arg0: i32) -> (i32, i32) {
    %c0_i32 = arith.constant 0 : i32
    %c0_i32_0 = arith.constant 0 : i32
    return %arg0, %c0_i32 : i32, i32
  }
  func.func @transform_1(%arg0: i32) -> (i32, i32) {
    %c0_i32 = arith.constant 0 : i32
    %c0_i32_0 = arith.constant 0 : i32
    return %arg0, %c0_i32 : i32, i32
  }
  func.func @transform_2(%arg0: i32) -> (i32, i32) {
    %c0_i32 = arith.constant 0 : i32
    %c0_i32_0 = arith.constant 0 : i32
    %c0_i32_1 = arith.constant 0 : i32
    return %c0_i32, %c0_i32_0 : i32, i32
  }
  func.func @transform_3(%arg0: i32) -> (i32, i32) {
    %c0_i32 = arith.constant 0 : i32
    %c0_i32_0 = arith.constant 0 : i32
    %c0_i32_1 = arith.constant 0 : i32
    return %c0_i32, %c0_i32_0 : i32, i32
  }
  func.func @transform_4(%arg0: i32) -> (i32, i32) {
    %c0_i32 = arith.constant 0 : i32
    %c0_i32_0 = arith.constant 0 : i32
    %c0_i32_1 = arith.constant 0 : i32
    return %c0_i32, %c0_i32_0 : i32, i32
  }
  func.func @transform_5(%arg0: i32) -> (i32, i32) {
    %c0_i32 = arith.constant 0 : i32
    %c0_i32_0 = arith.constant 0 : i32
    %c0_i32_1 = arith.constant 0 : i32
    return %c0_i32, %c0_i32_0 : i32, i32
  }
  func.func @transform_6(%arg0: i32) -> (i32, i32) {
    %c0_i32 = arith.constant 0 : i32
    %c0_i32_0 = arith.constant 0 : i32
    %c0_i32_1 = arith.constant 0 : i32
    return %c0_i32, %c0_i32_0 : i32, i32
  }
  func.func @transform_7(%arg0: i32) -> (i32, i32) {
    %c0_i32 = arith.constant 0 : i32
    %c0_i32_0 = arith.constant 0 : i32
    %c0_i32_1 = arith.constant 0 : i32
    return %c0_i32, %c0_i32_0 : i32, i32
  }
  func.func @transform_8(%arg0: i32) -> (i32, i32) {
    %c0_i32 = arith.constant 0 : i32
    %c0_i32_0 = arith.constant 0 : i32
    %c0_i32_1 = arith.constant 0 : i32
    return %c0_i32, %c0_i32_0 : i32, i32
  }
  func.func @transform_9(%arg0: i32) -> (i32, i32) {
    %c0_i32 = arith.constant 0 : i32
    %c0_i32_0 = arith.constant 0 : i32
    return %arg0, %c0_i32 : i32, i32
  }
}

</mosaic_0001>

<llo_original>
// kernel: tpu_custom_call.1
$region0: #{tpu_custom_call.1}
  #allocation0 [shape = 'u32[]', space=smem, size = 0x4, offset = 0x4, fixed_abs, tag = 'smem constant byte address 0x4 - core index']
  #allocation1 [shape = 'u32[72,128]{1,0:T(1,128)}', space=vmem, size = 0x9000, scoped, tag = 'internal scratch']
  %s0 = inlined_call_operand.hbm [shape: bf16[24,32], index: 0, kind: input, shape index: {}]
  %s1 = inlined_call_operand.hbm [shape: bf16[24,32], index: 1, kind: input, shape index: {}]
  %s2 = inlined_call_operand.hbm [shape: bf16[32,256], index: 2, kind: input, shape index: {}]
  %s3 = inlined_call_operand.hbm [shape: bf16[32,256], index: 3, kind: input, shape index: {}]
  %s4 = inlined_call_operand.vmem [shape: f32[1,256], index: 4, kind: input, shape index: {}]
  %s5 = inlined_call_operand.hbm [shape: bf16[256,256], index: 5, kind: input, shape index: {}]
  %s6 = inlined_call_operand.vmem [shape: f32[1,256], index: 6, kind: input, shape index: {}]
  %s7 = inlined_call_operand.hbm [shape: bf16[256,128], index: 7, kind: input, shape index: {}]
  %s8 = inlined_call_operand.vmem [shape: f32[1,128], index: 8, kind: input, shape index: {}]
  %s9 = inlined_call_operand.hbm [shape: f32[24,128], index: 9, kind: output, shape index: {}]
  %s10 = sld [smem:[#allocation0]]
  $region70: #{tpu_custom_call.1} parent=0
    _
  %s12 = ssub.s32 1, %s10
  %s13 = scalar_select 0, %s12, %s10
  $region1: #{tpu_custom_call.1} parent=0
    #allocation2 [shape = 'u8[6144]{0}', space=vmem, size = 0x1800, scoped, tag = 'input window, operand 0, single buffered']
    #allocation3 [shape = 's32[1]{0}', space=sflag, size = 0x4, scoped, tag = 'scoped memory for tpu_custom_call.1']
    #allocation4 [shape = 's32[1]{0}', space=sflag, size = 0x4, scoped, tag = 'scoped memory for tpu_custom_call.1']
    #allocation5 [shape = 'u8[6144]{0}', space=vmem, size = 0x1800, scoped, tag = 'input window, operand 1, single buffered']
    #allocation6 [shape = 's32[1]{0}', space=sflag, size = 0x4, scoped, tag = 'scoped memory for tpu_custom_call.1']
    #allocation7 [shape = 'u8[16384]{0}', space=vmem, size = 0x4000, scoped, tag = 'input window, operand 2, single buffered']
    #allocation8 [shape = 'u8[16384]{0}', space=vmem, size = 0x4000, scoped, tag = 'input window, operand 3, single buffered']
    #allocation9 [shape = 's32[1]{0}', space=sflag, size = 0x4, scoped, tag = 'scoped memory for tpu_custom_call.1']
    #allocation10 [shape = 'u8[131072]{0}', space=vmem, size = 0x20000, scoped, tag = 'input window, operand 5, single buffered']
    #allocation11 [shape = 'u8[65536]{0}', space=vmem, size = 0x10000, scoped, tag = 'input window, operand 7, single buffered']
    #allocation12 [shape = 's32[1]{0}', space=sflag, size = 0x4, scoped, tag = 'scoped memory for tpu_custom_call.1']
    #allocation13 [shape = 'u8[12288]{0}', space=vmem, size = 0x3000, scoped, tag = 'output window, operand 0, single buffered']
    %14 = vsyncpa [#allocation3], 0
    %15 = vsyncpa [#allocation6], 0
    %16 = vsyncpa [#allocation9], 0
    %17 = vsyncpa [#allocation12], 0
    %18 = vsyncpa [#allocation4], 0
    // Predicated region
    $region2: #{tpu_custom_call.1} parent=1 // pred_check
      _
    $region3: #{tpu_custom_call.1} parent=1 // pred_check_branch
      %20 = sbr.rel (0) target = $region5
    $region4: #{tpu_custom_call.1} parent=1 // pred_region
      %22 = vsyncadd [#allocation3], 0
      %s23 = sshll.u32 %s0, 4
      %s24 = int_to_ptr.hbm [resolvable:$true] %s23
      %s25 = sshll.u32 [#allocation2], 4
      %s26 = int_to_ptr.vmem [resolvable:$true] %s25
      %31 = dma.hbm_to_vmem [thread:$0]  %s24, 192, %s26, [#allocation3], 64, 64, 4
    $region5: #{tpu_custom_call.1} parent=1 // pred_fallthru
      _
    // Predicated region
    $region6: #{tpu_custom_call.1} parent=1 // pred_check
      _
    $region7: #{tpu_custom_call.1} parent=1 // pred_check_branch
      %33 = sbr.rel (0) target = $region9
    $region8: #{tpu_custom_call.1} parent=1 // pred_region
      %35 = vsyncadd [#allocation6], 0
      %s36 = sshll.u32 %s1, 4
      %s37 = int_to_ptr.hbm [resolvable:$true] %s36
      %s38 = sshll.u32 [#allocation5], 4
      %s39 = int_to_ptr.vmem [resolvable:$true] %s38
      %44 = dma.hbm_to_vmem [thread:$0]  %s37, 192, %s39, [#allocation6], 64, 64, 4
    $region9: #{tpu_custom_call.1} parent=1 // pred_fallthru
      _
    // Predicated region
    $region10: #{tpu_custom_call.1} parent=1 // pred_check
      _
    $region11: #{tpu_custom_call.1} parent=1 // pred_check_branch
      %46 = sbr.rel (0) target = $region13
    $region12: #{tpu_custom_call.1} parent=1 // pred_region
      %48 = vsyncadd [#allocation6], 0
      %s49 = sshll.u32 %s2, 4
      %s50 = int_to_ptr.hbm [resolvable:$true] %s49
      %s51 = sshll.u32 [#allocation7], 4
      %s52 = int_to_ptr.vmem [resolvable:$true] %s51
      %57 = dma.hbm_to_vmem [thread:$0]  %s50, 512, %s52, [#allocation6], 128, 128, 8
    $region13: #{tpu_custom_call.1} parent=1 // pred_fallthru
      _
    // Predicated region
    $region14: #{tpu_custom_call.1} parent=1 // pred_check
      _
    $region15: #{tpu_custom_call.1} parent=1 // pred_check_branch
      %59 = sbr.rel (0) target = $region17
    $region16: #{tpu_custom_call.1} parent=1 // pred_region
      %61 = vsyncadd [#allocation9], 0
      %s62 = sshll.u32 %s3, 4
      %s63 = int_to_ptr.hbm [resolvable:$true] %s62
      %s64 = sshll.u32 [#allocation8], 4
      %s65 = int_to_ptr.vmem [resolvable:$true] %s64
      %70 = dma.hbm_to_vmem [thread:$0]  %s63, 512, %s65, [#allocation9], 128, 128, 8
    $region17: #{tpu_custom_call.1} parent=1 // pred_fallthru
      _
    // Predicated region
    $region18: #{tpu_custom_call.1} parent=1 // pred_check
      _
    $region19: #{tpu_custom_call.1} parent=1 // pred_check_branch
      %72 = sbr.rel (0) target = $region21
    $region20: #{tpu_custom_call.1} parent=1 // pred_region
      _
    $region21: #{tpu_custom_call.1} parent=1 // pred_fallthru
      _
    // Predicated region
    $region22: #{tpu_custom_call.1} parent=1 // pred_check
      _
    $region23: #{tpu_custom_call.1} parent=1 // pred_check_branch
      %74 = sbr.rel (0) target = $region25
    $region24: #{tpu_custom_call.1} parent=1 // pred_region
      %76 = vsyncadd [#allocation9], 0
      %s77 = sshll.u32 %s5, 4
      %s78 = int_to_ptr.hbm [resolvable:$true] %s77
      %s79 = sshll.u32 [#allocation10], 4
      %s80 = int_to_ptr.vmem [resolvable:$true] %s79
      %85 = dma.hbm_to_vmem [thread:$0]  %s78, 4096, %s80, [#allocation9], 128, 128, 8
    $region25: #{tpu_custom_call.1} parent=1 // pred_fallthru
      _
    // Predicated region
    $region26: #{tpu_custom_call.1} parent=1 // pred_check
      _
    $region27: #{tpu_custom_call.1} parent=1 // pred_check_branch
      %87 = sbr.rel (0) target = $region29
    $region28: #{tpu_custom_call.1} parent=1 // pred_region
      _
    $region29: #{tpu_custom_call.1} parent=1 // pred_fallthru
      _
    // Predicated region
    $region30: #{tpu_custom_call.1} parent=1 // pred_check
      _
    $region31: #{tpu_custom_call.1} parent=1 // pred_check_branch
      %89 = sbr.rel (0) target = $region33
    $region32: #{tpu_custom_call.1} parent=1 // pred_region
      %91 = vsyncadd [#allocation12], 0
      %s92 = sshll.u32 %s7, 4
      %s93 = int_to_ptr.hbm [resolvable:$true] %s92
      %s94 = sshll.u32 [#allocation11], 4
      %s95 = int_to_ptr.vmem [resolvable:$true] %s94
      %100 = dma.hbm_to_vmem [thread:$0]  %s93, 2048, %s95, [#allocation12], 64, 64, 4
    $region33: #{tpu_custom_call.1} parent=1 // pred_fallthru
      _
    // Predicated region
    $region34: #{tpu_custom_call.1} parent=1 // pred_check
      _
    $region35: #{tpu_custom_call.1} parent=1 // pred_check_branch
      %102 = sbr.rel (0) target = $region37
    $region36: #{tpu_custom_call.1} parent=1 // pred_region
      _
    $region37: #{tpu_custom_call.1} parent=1 // pred_fallthru
      _
    // Predicated region
    $region38: #{tpu_custom_call.1} parent=1 // pred_check
      _
    $region39: #{tpu_custom_call.1} parent=1 // pred_check_branch
      %104 = sbr.rel (0) target = $region41
    $region40: #{tpu_custom_call.1} parent=1 // pred_region
      %106 = dma.done [#allocation3], 192
    $region41: #{tpu_custom_call.1} parent=1 // pred_fallthru
      _
    // Predicated region
    $region42: #{tpu_custom_call.1} parent=1 // pred_check
      _
    $region43: #{tpu_custom_call.1} parent=1 // pred_check_branch
      %108 = sbr.rel (0) target = $region45
    $region44: #{tpu_custom_call.1} parent=1 // pred_region
      %110 = dma.done [#allocation6], 192
    $region45: #{tpu_custom_call.1} parent=1 // pred_fallthru
      _
    // Predicated region
    $region46: #{tpu_custom_call.1} parent=1 // pred_check
      _
    $region47: #{tpu_custom_call.1} parent=1 // pred_check_branch
      %112 = sbr.rel (0) target = $region49
    $region48: #{tpu_custom_call.1} parent=1 // pred_region
      %114 = dma.done [#allocation6], 512
    $region49: #{tpu_custom_call.1} parent=1 // pred_fallthru
      _
    // Predicated region
    $region50: #{tpu_custom_call.1} parent=1 // pred_check
      _
    $region51: #{tpu_custom_call.1} parent=1 // pred_check_branch
      %116 = sbr.rel (0) target = $region53
    $region52: #{tpu_custom_call.1} parent=1 // pred_region
      %118 = dma.done [#allocation9], 512
    $region53: #{tpu_custom_call.1} parent=1 // pred_fallthru
      _
    // Predicated region
    $region54: #{tpu_custom_call.1} parent=1 // pred_check
      _
    $region55: #{tpu_custom_call.1} parent=1 // pred_check_branch
      %120 = sbr.rel (0) target = $region57
    $region56: #{tpu_custom_call.1} parent=1 // pred_region
      %122 = dma.done [#allocation9], 4096
    $region57: #{tpu_custom_call.1} parent=1 // pred_fallthru
      _
    // Predicated region
    $region58: #{tpu_custom_call.1} parent=1 // pred_check
      _
    $region59: #{tpu_custom_call.1} parent=1 // pred_check_branch
      %124 = sbr.rel (0) target = $region61
    $region60: #{tpu_custom_call.1} parent=1 // pred_region
      %126 = dma.done [#allocation12], 2048
    $region61: #{tpu_custom_call.1} parent=1 // pred_fallthru
      _
    %v128 = vld [vmem:[#allocation2] sm:$0xf]
    %v129 = vld [vmem:[#allocation2 + $0x4] sm:$0xf]
    %v130 = vld [vmem:[#allocation2 + $0x8] sm:$0xf]
    %v131 = vld [vmem:[#allocation7] sm:$0xff]
    %v132 = vld [vmem:[#allocation7 + $0x8] sm:$0xff]
    %v133 = vld [vmem:[#allocation7 + $0x10] sm:$0xff]
    %v134 = vld [vmem:[#allocation7 + $0x18] sm:$0xff]
    %v135 = vld [vmem:[#allocation5] sm:$0xf]
    %v136 = vld [vmem:[#allocation5 + $0x4] sm:$0xf]
    %v137 = vld [vmem:[#allocation5 + $0x8] sm:$0xf]
    %v138 = vld [vmem:[#allocation8] sm:$0xff]
    %v139 = vld [vmem:[#allocation8 + $0x8] sm:$0xff]
    %v140 = vld [vmem:[#allocation8 + $0x10] sm:$0xff]
    %v141 = vld [vmem:[#allocation8 + $0x18] sm:$0xff]
    %v145 = vunpack.c.l.b16 %v135
    %v146 = vunpack.c.l.b16 %v136
    %v147 = vunpack.c.l.b16 %v137
    %v148 = vpack.c.b16 %v146, %v145
    %v149 = vpack.c.b16 %v147, %v147
    %v154 = vunpack.c.l.b16 %v138
    %v155 = vunpack.c.h.b16 %v138
    %v156 = vunpack.c.l.b16 %v139
    %v157 = vunpack.c.h.b16 %v139
    %v158 = vunpack.c.l.b16 %v140
    %v159 = vunpack.c.h.b16 %v140
    %v160 = vunpack.c.l.b16 %v141
    %v161 = vunpack.c.h.b16 %v141
    %v162 = vpack.c.b16 %v156, %v154
    %v163 = vpack.c.b16 %v157, %v155
    %v164 = vpack.c.b16 %v160, %v158
    %v165 = vpack.c.b16 %v161, %v159
    %vm170 = vcmask 261120
    %v172 = vsel %vm170, %v148, 0
    %v175 = vsel %vm170, %v149, 0
    %177 = vmatpush.bf16.msra.mxu0 0
    %178 = vmatpush.bf16.msra.mxu0 0
    %179 = vmatpush.bf16.msra.mxu0 0
    %180 = vmatpush.bf16.msra.mxu0 0
    %181 = vmatpush.bf16.msra.mxu0 0
    %182 = vmatpush.bf16.msra.mxu0 0
    %183 = vmatpush.bf16.msra.mxu0 %v164
    %184 = vmatpush.bf16.msra.mxu0 %v162
    %185 = vmatmul.bf16.gmra.mxu0 %v172
    %v186 = vpop.f32.mrf.mxu0
    %v187 = vadd.f32 0.0, %v186
    %v188 = vpop.f32.mrf.mxu0
    %v189 = vadd.f32 0.0, %v188
    %190 = vmatmul.bf16.gmra.mxu0 %v175
    %v191 = vpop.f32.mrf.mxu0
    %v192 = vadd.f32 0.0, %v191
    %v193 = vpop.f32.mrf.mxu0
    %194 = vdwg.mxu0
    %195 = vmatpush.bf16.msra.mxu0 0
    %196 = vmatpush.bf16.msra.mxu0 0
    %197 = vmatpush.bf16.msra.mxu0 0
    %198 = vmatpush.bf16.msra.mxu0 0
    %199 = vmatpush.bf16.msra.mxu0 0
    %200 = vmatpush.bf16.msra.mxu0 0
    %201 = vmatpush.bf16.msra.mxu0 %v165
    %202 = vmatpush.bf16.msra.mxu0 %v163
    %203 = vmatmul.bf16.gmra.mxu0 %v172
    %v204 = vpop.f32.mrf.mxu0
    %v205 = vadd.f32 0.0, %v204
    %v206 = vpop.f32.mrf.mxu0
    %v207 = vadd.f32 0.0, %v206
    %208 = vmatmul.bf16.gmra.mxu0 %v175
    %v209 = vpop.f32.mrf.mxu0
    %v210 = vadd.f32 0.0, %v209
    %v211 = vpop.f32.mrf.mxu0
    %212 = vdwg.mxu0
    %v216 = vunpack.c.l.b16 %v128
    %v217 = vunpack.c.l.b16 %v129
    %v218 = vunpack.c.l.b16 %v130
    %v219 = vpack.c.b16 %v217, %v216
    %v220 = vpack.c.b16 %v218, %v218
    %v225 = vunpack.c.l.b16 %v131
    %v226 = vunpack.c.h.b16 %v131
    %v227 = vunpack.c.l.b16 %v132
    %v228 = vunpack.c.h.b16 %v132
    %v229 = vunpack.c.l.b16 %v133
    %v230 = vunpack.c.h.b16 %v133
    %v231 = vunpack.c.l.b16 %v134
    %v232 = vunpack.c.h.b16 %v134
    %v233 = vpack.c.b16 %v227, %v225
    %v234 = vpack.c.b16 %v228, %v226
    %v235 = vpack.c.b16 %v231, %v229
    %v236 = vpack.c.b16 %v232, %v230
    %v242 = vsel %vm170, %v219, 0
    %v245 = vsel %vm170, %v220, 0
    %247 = vmatpush.bf16.msra.mxu0 0
    %248 = vmatpush.bf16.msra.mxu0 0
    %249 = vmatpush.bf16.msra.mxu0 0
    %250 = vmatpush.bf16.msra.mxu0 0
    %251 = vmatpush.bf16.msra.mxu0 0
    %252 = vmatpush.bf16.msra.mxu0 0
    %253 = vmatpush.bf16.msra.mxu0 %v235
    %254 = vmatpush.bf16.msra.mxu0 %v233
    %255 = vmatmul.bf16.gmra.mxu0 %v242
    %v256 = vpop.f32.mrf.mxu0
    %v257 = vadd.f32 %v187, %v256
    %v258 = vpop.f32.mrf.mxu0
    %v259 = vadd.f32 %v189, %v258
    %260 = vmatmul.bf16.gmra.mxu0 %v245
    %v261 = vpop.f32.mrf.mxu0
    %v262 = vadd.f32 %v192, %v261
    %v263 = vpop.f32.mrf.mxu0
    %264 = vdwg.mxu0
    %265 = vmatpush.bf16.msra.mxu0 0
    %266 = vmatpush.bf16.msra.mxu0 0
    %267 = vmatpush.bf16.msra.mxu0 0
    %268 = vmatpush.bf16.msra.mxu0 0
    %269 = vmatpush.bf16.msra.mxu0 0
    %270 = vmatpush.bf16.msra.mxu0 0
    %271 = vmatpush.bf16.msra.mxu0 %v236
    %272 = vmatpush.bf16.msra.mxu0 %v234
    %273 = vmatmul.bf16.gmra.mxu0 %v242
    %v274 = vpop.f32.mrf.mxu0
    %v275 = vadd.f32 %v205, %v274
    %v276 = vpop.f32.mrf.mxu0
    %v277 = vadd.f32 %v207, %v276
    %278 = vmatmul.bf16.gmra.mxu0 %v245
    %v279 = vpop.f32.mrf.mxu0
    %v280 = vadd.f32 %v210, %v279
    %v281 = vpop.f32.mrf.mxu0
    %282 = vdwg.mxu0
    %v283 = vld [vmem:[%s4] sm:$0x3]
    %v285 = vperm.slane %v283, 0
    %v286 = vperm.slane %v283, 1
    %v289 = vadd.f32 %v257, %v285
    %v290 = vadd.f32 %v275, %v286
    %v291 = vadd.f32 %v259, %v285
    %v292 = vadd.f32 %v277, %v286
    %v293 = vadd.f32 %v262, %v285
    %v294 = vadd.f32 %v280, %v286
    %v295 = vmax.f32 %v289, 0.0
    %v296 = vmax.f32 %v290, 0.0
    %v297 = vmax.f32 %v291, 0.0
    %v298 = vmax.f32 %v292, 0.0
    %v299 = vmax.f32 %v293, 0.0
    %v300 = vmax.f32 %v294, 0.0
    %v301 = vpack.c.bf16 %v297, %v295
    %v302 = vpack.c.bf16 %v298, %v296
    %v303 = vpack.c.bf16 %v299, %v299
    %v304 = vpack.c.bf16 %v300, %v300
    %v305 = vld [vmem:[#allocation10] sm:$0xff]
    %v306 = vld [vmem:[#allocation10 + $0x8] sm:$0xff]
    %v307 = vld [vmem:[#allocation10 + $0x10] sm:$0xff]
    %v308 = vld [vmem:[#allocation10 + $0x18] sm:$0xff]
    %v309 = vld [vmem:[#allocation10 + $0x20] sm:$0xff]
    %v310 = vld [vmem:[#allocation10 + $0x28] sm:$0xff]
    %v311 = vld [vmem:[#allocation10 + $0x30] sm:$0xff]
    %v312 = vld [vmem:[#allocation10 + $0x38] sm:$0xff]
    %v313 = vld [vmem:[#allocation10 + $0x40] sm:$0xff]
    %v314 = vld [vmem:[#allocation10 + $0x48] sm:$0xff]
    %v315 = vld [vmem:[#allocation10 + $0x50] sm:$0xff]
    %v316 = vld [vmem:[#allocation10 + $0x58] sm:$0xff]
    %v317 = vld [vmem:[#allocation10 + $0x60] sm:$0xff]
    %v318 = vld [vmem:[#allocation10 + $0x68] sm:$0xff]
    %v319 = vld [vmem:[#allocation10 + $0x70] sm:$0xff]
    %v320 = vld [vmem:[#allocation10 + $0x78] sm:$0xff]
    %v321 = vld [vmem:[#allocation10 + $0x80] sm:$0xff]
    %v322 = vld [vmem:[#allocation10 + $0x88] sm:$0xff]
    %v323 = vld [vmem:[#allocation10 + $0x90] sm:$0xff]
    %v324 = vld [vmem:[#allocation10 + $0x98] sm:$0xff]
    %v325 = vld [vmem:[#allocation10 + $0xa0] sm:$0xff]
    %v326 = vld [vmem:[#allocation10 + $0xa8] sm:$0xff]
    %v327 = vld [vmem:[#allocation10 + $0xb0] sm:$0xff]
    %v328 = vld [vmem:[#allocation10 + $0xb8] sm:$0xff]
    %v329 = vld [vmem:[#allocation10 + $0xc0] sm:$0xff]
    %v330 = vld [vmem:[#allocation10 + $0xc8] sm:$0xff]
    %v331 = vld [vmem:[#allocation10 + $0xd0] sm:$0xff]
    %v332 = vld [vmem:[#allocation10 + $0xd8] sm:$0xff]
    %v333 = vld [vmem:[#allocation10 + $0xe0] sm:$0xff]
    %v334 = vld [vmem:[#allocation10 + $0xe8] sm:$0xff]
    %v335 = vld [vmem:[#allocation10 + $0xf0] sm:$0xff]
    %v336 = vld [vmem:[#allocation10 + $0xf8] sm:$0xff]
    %v337 = vld [vmem:[%s6] sm:$0x3]
    %v339 = vperm.slane %v337, 0
    %v340 = vperm.slane %v337, 1
    %v375 = vunpack.c.l.b16 %v305
    %v376 = vunpack.c.h.b16 %v305
    %v377 = vunpack.c.l.b16 %v306
    %v378 = vunpack.c.h.b16 %v306
    %v379 = vunpack.c.l.b16 %v307
    %v380 = vunpack.c.h.b16 %v307
    %v381 = vunpack.c.l.b16 %v308
    %v382 = vunpack.c.h.b16 %v308
    %v383 = vunpack.c.l.b16 %v309
    %v384 = vunpack.c.h.b16 %v309
    %v385 = vunpack.c.l.b16 %v310
    %v386 = vunpack.c.h.b16 %v310
    %v387 = vunpack.c.l.b16 %v311
    %v388 = vunpack.c.h.b16 %v311
    %v389 = vunpack.c.l.b16 %v312
    %v390 = vunpack.c.h.b16 %v312
    %v391 = vunpack.c.l.b16 %v313
    %v392 = vunpack.c.h.b16 %v313
    %v393 = vunpack.c.l.b16 %v314
    %v394 = vunpack.c.h.b16 %v314
    %v395 = vunpack.c.l.b16 %v315
    %v396 = vunpack.c.h.b16 %v315
    %v397 = vunpack.c.l.b16 %v316
    %v398 = vunpack.c.h.b16 %v316
    %v399 = vunpack.c.l.b16 %v317
    %v400 = vunpack.c.h.b16 %v317
    %v401 = vunpack.c.l.b16 %v318
    %v402 = vunpack.c.h.b16 %v318
    %v403 = vunpack.c.l.b16 %v319
    %v404 = vunpack.c.h.b16 %v319
    %v405 = vunpack.c.l.b16 %v320
    %v406 = vunpack.c.h.b16 %v320
    %v407 = vunpack.c.l.b16 %v321
    %v408 = vunpack.c.h.b16 %v321
    %v409 = vunpack.c.l.b16 %v322
    %v410 = vunpack.c.h.b16 %v322
    %v411 = vunpack.c.l.b16 %v323
    %v412 = vunpack.c.h.b16 %v323
    %v413 = vunpack.c.l.b16 %v324
    %v414 = vunpack.c.h.b16 %v324
    %v415 = vunpack.c.l.b16 %v325
    %v416 = vunpack.c.h.b16 %v325
    %v417 = vunpack.c.l.b16 %v326
    %v418 = vunpack.c.h.b16 %v326
    %v419 = vunpack.c.l.b16 %v327
    %v420 = vunpack.c.h.b16 %v327
    %v421 = vunpack.c.l.b16 %v328
    %v422 = vunpack.c.h.b16 %v328
    %v423 = vunpack.c.l.b16 %v329
    %v424 = vunpack.c.h.b16 %v329
    %v425 = vunpack.c.l.b16 %v330
    %v426 = vunpack.c.h.b16 %v330
    %v427 = vunpack.c.l.b16 %v331
    %v428 = vunpack.c.h.b16 %v331
    %v429 = vunpack.c.l.b16 %v332
    %v430 = vunpack.c.h.b16 %v332
    %v431 = vunpack.c.l.b16 %v333
    %v432 = vunpack.c.h.b16 %v333
    %v433 = vunpack.c.l.b16 %v334
    %v434 = vunpack.c.h.b16 %v334
    %v435 = vunpack.c.l.b16 %v335
    %v436 = vunpack.c.h.b16 %v335
    %v437 = vunpack.c.l.b16 %v336
    %v438 = vunpack.c.h.b16 %v336
    %v439 = vpack.c.b16 %v377, %v375
    %v440 = vpack.c.b16 %v378, %v376
    %v441 = vpack.c.b16 %v381, %v379
    %v442 = vpack.c.b16 %v382, %v380
    %v443 = vpack.c.b16 %v385, %v383
    %v444 = vpack.c.b16 %v386, %v384
    %v445 = vpack.c.b16 %v389, %v387
    %v446 = vpack.c.b16 %v390, %v388
    %v447 = vpack.c.b16 %v393, %v391
    %v448 = vpack.c.b16 %v394, %v392
    %v449 = vpack.c.b16 %v397, %v395
    %v450 = vpack.c.b16 %v398, %v396
    %v451 = vpack.c.b16 %v401, %v399
    %v452 = vpack.c.b16 %v402, %v400
    %v453 = vpack.c.b16 %v405, %v403
    %v454 = vpack.c.b16 %v406, %v404
    %v455 = vpack.c.b16 %v409, %v407
    %v456 = vpack.c.b16 %v410, %v408
    %v457 = vpack.c.b16 %v413, %v411
    %v458 = vpack.c.b16 %v414, %v412
    %v459 = vpack.c.b16 %v417, %v415
    %v460 = vpack.c.b16 %v418, %v416
    %v461 = vpack.c.b16 %v421, %v419
    %v462 = vpack.c.b16 %v422, %v420
    %v463 = vpack.c.b16 %v425, %v423
    %v464 = vpack.c.b16 %v426, %v424
    %v465 = vpack.c.b16 %v429, %v427
    %v466 = vpack.c.b16 %v430, %v428
    %v467 = vpack.c.b16 %v433, %v431
    %v468 = vpack.c.b16 %v434, %v432
    %v469 = vpack.c.b16 %v437, %v435
    %v470 = vpack.c.b16 %v438, %v436
    %503 = vmatpush.bf16.msra.mxu0 %v453
    %504 = vmatpush.bf16.msra.mxu0 %v451
    %505 = vmatpush.bf16.msra.mxu0 %v449
    %506 = vmatpush.bf16.msra.mxu0 %v447
    %507 = vmatpush.bf16.msra.mxu0 %v445
    %508 = vmatpush.bf16.msra.mxu0 %v443
    %509 = vmatpush.bf16.msra.mxu0 %v441
    %510 = vmatpush.bf16.msra.mxu0 %v439
    %511 = vmatmul.bf16.gmra.mxu0 %v301
    %v512 = vpop.f32.mrf.mxu0
    %v513 = vadd.f32 %v339, %v512
    %v514 = vpop.f32.mrf.mxu0
    %v515 = vadd.f32 %v339, %v514
    %516 = vmatmul.bf16.gmra.mxu0 %v303
    %v517 = vpop.f32.mrf.mxu0
    %v518 = vadd.f32 %v339, %v517
    %v519 = vpop.f32.mrf.mxu0
    %520 = vdwg.mxu0
    %521 = vmatpush.bf16.msra.mxu0 %v469
    %522 = vmatpush.bf16.msra.mxu0 %v467
    %523 = vmatpush.bf16.msra.mxu0 %v465
    %524 = vmatpush.bf16.msra.mxu0 %v463
    %525 = vmatpush.bf16.msra.mxu0 %v461
    %526 = vmatpush.bf16.msra.mxu0 %v459
    %527 = vmatpush.bf16.msra.mxu0 %v457
    %528 = vmatpush.bf16.msra.mxu0 %v455
    %529 = vmatmul.bf16.gmra.mxu0 %v302
    %v530 = vpop.f32.mrf.mxu0
    %v531 = vadd.f32 %v513, %v530
    %v532 = vpop.f32.mrf.mxu0
    %v533 = vadd.f32 %v515, %v532
    %534 = vmatmul.bf16.gmra.mxu0 %v304
    %v535 = vpop.f32.mrf.mxu0
    %v536 = vadd.f32 %v518, %v535
    %v537 = vpop.f32.mrf.mxu0
    %538 = vdwg.mxu0
    %539 = vmatpush.bf16.msra.mxu0 %v454
    %540 = vmatpush.bf16.msra.mxu0 %v452
    %541 = vmatpush.bf16.msra.mxu0 %v450
    %542 = vmatpush.bf16.msra.mxu0 %v448
    %543 = vmatpush.bf16.msra.mxu0 %v446
    %544 = vmatpush.bf16.msra.mxu0 %v444
    %545 = vmatpush.bf16.msra.mxu0 %v442
    %546 = vmatpush.bf16.msra.mxu0 %v440
    %547 = vmatmul.bf16.gmra.mxu0 %v301
    %v548 = vpop.f32.mrf.mxu0
    %v549 = vadd.f32 %v340, %v548
    %v550 = vpop.f32.mrf.mxu0
    %v551 = vadd.f32 %v340, %v550
    %552 = vmatmul.bf16.gmra.mxu0 %v303
    %v553 = vpop.f32.mrf.mxu0
    %v554 = vadd.f32 %v340, %v553
    %v555 = vpop.f32.mrf.mxu0
    %556 = vdwg.mxu0
    %557 = vmatpush.bf16.msra.mxu0 %v470
    %558 = vmatpush.bf16.msra.mxu0 %v468
    %559 = vmatpush.bf16.msra.mxu0 %v466
    %560 = vmatpush.bf16.msra.mxu0 %v464
    %561 = vmatpush.bf16.msra.mxu0 %v462
    %562 = vmatpush.bf16.msra.mxu0 %v460
    %563 = vmatpush.bf16.msra.mxu0 %v458
    %564 = vmatpush.bf16.msra.mxu0 %v456
    %565 = vmatmul.bf16.gmra.mxu0 %v302
    %v566 = vpop.f32.mrf.mxu0
    %v567 = vadd.f32 %v549, %v566
    %v568 = vpop.f32.mrf.mxu0
    %v569 = vadd.f32 %v551, %v568
    %570 = vmatmul.bf16.gmra.mxu0 %v304
    %v571 = vpop.f32.mrf.mxu0
    %v572 = vadd.f32 %v554, %v571
    %v573 = vpop.f32.mrf.mxu0
    %574 = vdwg.mxu0
    %v575 = vmax.f32 %v531, 0.0
    %v576 = vmax.f32 %v567, 0.0
    %v577 = vmax.f32 %v533, 0.0
    %v578 = vmax.f32 %v569, 0.0
    %v579 = vmax.f32 %v536, 0.0
    %v580 = vmax.f32 %v572, 0.0
    %v581 = vpack.c.bf16 %v577, %v575
    %v582 = vpack.c.bf16 %v578, %v576
    %v583 = vpack.c.bf16 %v579, %v579
    %v584 = vpack.c.bf16 %v580, %v580
    %v585 = vld [vmem:[#allocation11] sm:$0xf]
    %v586 = vld [vmem:[#allocation11 + $0x4] sm:$0xf]
    %v587 = vld [vmem:[#allocation11 + $0x8] sm:$0xf]
    %v588 = vld [vmem:[#allocation11 + $0xc] sm:$0xf]
    %v589 = vld [vmem:[#allocation11 + $0x10] sm:$0xf]
    %v590 = vld [vmem:[#allocation11 + $0x14] sm:$0xf]
    %v591 = vld [vmem:[#allocation11 + $0x18] sm:$0xf]
    %v592 = vld [vmem:[#allocation11 + $0x1c] sm:$0xf]
    %v593 = vld [vmem:[#allocation11 + $0x20] sm:$0xf]
    %v594 = vld [vmem:[#allocation11 + $0x24] sm:$0xf]
    %v595 = vld [vmem:[#allocation11 + $0x28] sm:$0xf]
    %v596 = vld [vmem:[#allocation11 + $0x2c] sm:$0xf]
    %v597 = vld [vmem:[#allocation11 + $0x30] sm:$0xf]
    %v598 = vld [vmem:[#allocation11 + $0x34] sm:$0xf]
    %v599 = vld [vmem:[#allocation11 + $0x38] sm:$0xf]
    %v600 = vld [vmem:[#allocation11 + $0x3c] sm:$0xf]
    %v601 = vld [vmem:[#allocation11 + $0x40] sm:$0xf]
    %v602 = vld [vmem:[#allocation11 + $0x44] sm:$0xf]
    %v603 = vld [vmem:[#allocation11 + $0x48] sm:$0xf]
    %v604 = vld [vmem:[#allocation11 + $0x4c] sm:$0xf]
    %v605 = vld [vmem:[#allocation11 + $0x50] sm:$0xf]
    %v606 = vld [vmem:[#allocation11 + $0x54] sm:$0xf]
    %v607 = vld [vmem:[#allocation11 + $0x58] sm:$0xf]
    %v608 = vld [vmem:[#allocation11 + $0x5c] sm:$0xf]
    %v609 = vld [vmem:[#allocation11 + $0x60] sm:$0xf]
    %v610 = vld [vmem:[#allocation11 + $0x64] sm:$0xf]
    %v611 = vld [vmem:[#allocation11 + $0x68] sm:$0xf]
    %v612 = vld [vmem:[#allocation11 + $0x6c] sm:$0xf]
    %v613 = vld [vmem:[#allocation11 + $0x70] sm:$0xf]
    %v614 = vld [vmem:[#allocation11 + $0x74] sm:$0xf]
    %v615 = vld [vmem:[#allocation11 + $0x78] sm:$0xf]
    %v616 = vld [vmem:[#allocation11 + $0x7c] sm:$0xf]
    %v617 = vld [vmem:[%s8] sm:$0x1]
    %v619 = vperm.slane %v617, 0
    %v653 = vunpack.c.l.b16 %v585
    %v654 = vunpack.c.l.b16 %v586
    %v655 = vunpack.c.l.b16 %v587
    %v656 = vunpack.c.l.b16 %v588
    %v657 = vunpack.c.l.b16 %v589
    %v658 = vunpack.c.l.b16 %v590
    %v659 = vunpack.c.l.b16 %v591
    %v660 = vunpack.c.l.b16 %v592
    %v661 = vunpack.c.l.b16 %v593
    %v662 = vunpack.c.l.b16 %v594
    %v663 = vunpack.c.l.b16 %v595
    %v664 = vunpack.c.l.b16 %v596
    %v665 = vunpack.c.l.b16 %v597
    %v666 = vunpack.c.l.b16 %v598
    %v667 = vunpack.c.l.b16 %v599
    %v668 = vunpack.c.l.b16 %v600
    %v669 = vunpack.c.l.b16 %v601
    %v670 = vunpack.c.l.b16 %v602
    %v671 = vunpack.c.l.b16 %v603
    %v672 = vunpack.c.l.b16 %v604
    %v673 = vunpack.c.l.b16 %v605
    %v674 = vunpack.c.l.b16 %v606
    %v675 = vunpack.c.l.b16 %v607
    %v676 = vunpack.c.l.b16 %v608
    %v677 = vunpack.c.l.b16 %v609
    %v678 = vunpack.c.l.b16 %v610
    %v679 = vunpack.c.l.b16 %v611
    %v680 = vunpack.c.l.b16 %v612
    %v681 = vunpack.c.l.b16 %v613
    %v682 = vunpack.c.l.b16 %v614
    %v683 = vunpack.c.l.b16 %v615
    %v684 = vunpack.c.l.b16 %v616
    %v685 = vpack.c.b16 %v654, %v653
    %v686 = vpack.c.b16 %v656, %v655
    %v687 = vpack.c.b16 %v658, %v657
    %v688 = vpack.c.b16 %v660, %v659
    %v689 = vpack.c.b16 %v662, %v661
    %v690 = vpack.c.b16 %v664, %v663
    %v691 = vpack.c.b16 %v666, %v665
    %v692 = vpack.c.b16 %v668, %v667
    %v693 = vpack.c.b16 %v670, %v669
    %v694 = vpack.c.b16 %v672, %v671
    %v695 = vpack.c.b16 %v674, %v673
    %v696 = vpack.c.b16 %v676, %v675
    %v697 = vpack.c.b16 %v678, %v677
    %v698 = vpack.c.b16 %v680, %v679
    %v699 = vpack.c.b16 %v682, %v681
    %v700 = vpack.c.b16 %v684, %v683
    %717 = vmatpush.bf16.msra.mxu0 %v692
    %718 = vmatpush.bf16.msra.mxu0 %v691
    %719 = vmatpush.bf16.msra.mxu0 %v690
    %720 = vmatpush.bf16.msra.mxu0 %v689
    %721 = vmatpush.bf16.msra.mxu0 %v688
    %722 = vmatpush.bf16.msra.mxu0 %v687
    %723 = vmatpush.bf16.msra.mxu0 %v686
    %724 = vmatpush.bf16.msra.mxu0 %v685
    %725 = vmatmul.bf16.gmra.mxu0 %v581
    %v726 = vpop.f32.mrf.mxu0
    %v727 = vadd.f32 %v619, %v726
    %v728 = vpop.f32.mrf.mxu0
    %v729 = vadd.f32 %v619, %v728
    %730 = vmatmul.bf16.gmra.mxu0 %v583
    %v731 = vpop.f32.mrf.mxu0
    %v732 = vadd.f32 %v619, %v731
    %v733 = vpop.f32.mrf.mxu0
    %734 = vdwg.mxu0
    %735 = vmatpush.bf16.msra.mxu0 %v700
    %736 = vmatpush.bf16.msra.mxu0 %v699
    %737 = vmatpush.bf16.msra.mxu0 %v698
    %738 = vmatpush.bf16.msra.mxu0 %v697
    %739 = vmatpush.bf16.msra.mxu0 %v696
    %740 = vmatpush.bf16.msra.mxu0 %v695
    %741 = vmatpush.bf16.msra.mxu0 %v694
    %742 = vmatpush.bf16.msra.mxu0 %v693
    %743 = vmatmul.bf16.gmra.mxu0 %v582
    %v744 = vpop.f32.mrf.mxu0
    %v745 = vadd.f32 %v727, %v744
    %v746 = vpop.f32.mrf.mxu0
    %v747 = vadd.f32 %v729, %v746
    %748 = vmatmul.bf16.gmra.mxu0 %v584
    %v749 = vpop.f32.mrf.mxu0
    %v750 = vadd.f32 %v732, %v749
    %v751 = vpop.f32.mrf.mxu0
    %752 = vdwg.mxu0
    %753 = vst [vmem:[#allocation13] sm:$0xff] %v745
    %754 = vst [vmem:[#allocation13 + $0x8] sm:$0xff] %v747
    %755 = vst [vmem:[#allocation13 + $0x10] sm:$0xff] %v750
    // Predicated region
    $region62: #{tpu_custom_call.1} parent=1 // pred_check
      _
    $region63: #{tpu_custom_call.1} parent=1 // pred_check_branch
      %757 = sbr.rel (0) target = $region65
    $region64: #{tpu_custom_call.1} parent=1 // pred_region
      %759 = vsyncadd [#allocation4], 0
      %s760 = sshll.u32 [#allocation13], 4
      %s761 = int_to_ptr.vmem [resolvable:$true] %s760
      %s762 = sshll.u32 %s9, 4
      %s763 = int_to_ptr.hbm [resolvable:$true] %s762
      %768 = dma.vmem_to_hbm [thread:$0]  %s761, 384, %s763, [#allocation4], 128, 128, 8
    $region65: #{tpu_custom_call.1} parent=1 // pred_fallthru
      _
    // Predicated region
    $region66: #{tpu_custom_call.1} parent=1 // pred_check
      _
    $region67: #{tpu_custom_call.1} parent=1 // pred_check_branch
      %770 = sbr.rel (0) target = $region69
    $region68: #{tpu_custom_call.1} parent=1 // pred_region
      %772 = dma.done [#allocation4], 384
    $region69: #{tpu_custom_call.1} parent=1 // pred_fallthru
      _
    %773 = vsyncpa [#allocation3], 1
    %774 = vsyncpa [#allocation6], 1
    %775 = vsyncpa [#allocation9], 1
    %776 = vsyncpa [#allocation12], 1
    %777 = vsyncpa [#allocation4], 1

</llo_original>
